<compile_context>
chip_gen: v5e
topology: v5e:2x2
jax: 0.10.0
libtpu: 0.0.40
codegen_flags: <defaults>
</compile_context>

<pallas_src>
import functools

import jax
import jax.numpy as jnp
from jax.experimental import pallas as pl
from jax.experimental.pallas import tpu as pltpu


def _round_up(x: int, m: int) -> int:
    return ((x + m - 1) // m) * m


def _vmem_limit_bytes() -> int:
    """~3/4 of physical VMEM: ~96 MiB on v5e/v6e (128 MiB), ~48 MiB on v7x (64 MiB)."""
    try:
        cap = pltpu.get_tpu_info().vmem_capacity_bytes
    except Exception:
        cap = 64 * 1024 * 1024  # conservative (v7x-sized) fallback
    return (int(cap) * 3) // 4


def _mlp_kernel(n_linear, *refs):
    """refs = (x_ref, w0, b0, w1, b1, ..., w_{n-1}, b_{n-1}, o_ref).

    x_ref: (TILE_B, n_features) f32 tile of the batch (streamed per grid step).
    w_i:   (in_i, out_i) bf16, VMEM-resident (single-buffered).
    b_i:   (1, out_i)    f32,  VMEM-resident (single-buffered).
    o_ref: (TILE_B, n_classes) f32 tile.
    """
    x_ref = refs[0]
    o_ref = refs[-1]
    params = refs[1:-1]

    # f32 -> bf16 cast in-kernel (VPU work hidden under MXU/DMA).
    h = x_ref[...].astype(jnp.bfloat16)
    for i in range(n_linear):
        w = params[2 * i][...]       # (in_i, out_i) bf16
        b = params[2 * i + 1][...]   # (1, out_i)    f32
        acc = jnp.dot(h, w, preferred_element_type=jnp.float32) + b
        if i < n_linear - 1:
            h = jnp.maximum(acc, 0.0).astype(jnp.bfloat16)  # ReLU in f32, back to bf16
        else:
            h = acc
    o_ref[...] = h.astype(o_ref.dtype)


def prepare_mlp_params(params):
    """One-time weight prep: pad hidden boundaries to 128 lanes, cast W to bf16.

    The input-feature dim (W0's K) and the output-class dim (last W's N) stay
    unpadded — they are full-extent block dims, exempt from the 128-lane rule.
    params: list of (W_t (in, out) f32, b (1, out) f32), PyTorch layer order.
    Returns (flat_params_tuple, meta_dict).
    """
    n_linear = len(params)
    n_features = params[0][0].shape[0]
    n_classes = params[-1][0].shape[1]
    sizes = [n_features] + [w.shape[1] for (w, _) in params]
    padded = [sizes[0]] + [_round_up(s, 128) for s in sizes[1:-1]] + [sizes[-1]]

    flat = []
    for li, (w, b) in enumerate(params):
        in_p, out_p = padded[li], padded[li + 1]
        wp = jnp.zeros((in_p, out_p), jnp.bfloat16)
        wp = wp.at[: w.shape[0], : w.shape[1]].set(w.astype(jnp.bfloat16))
        bp = jnp.zeros((1, out_p), jnp.float32)
        bp = bp.at[:, : b.shape[1]].set(b.astype(jnp.float32))
        flat.extend([wp, bp])

    meta = {
        "n_linear": n_linear,
        "n_features": n_features,
        "n_classes": n_classes,
        "padded": tuple(padded),
    }
    return tuple(flat), meta


def mlp_classifier_forward(x, flat_params, meta, *, tile_b=512):
    """x: (batch, n_features) f32.  flat_params/meta from prepare_mlp_params."""
    n_linear = meta["n_linear"]
    n_classes = meta["n_classes"]
    padded = meta["padded"]
    batch, n_features = x.shape
    assert n_features == meta["n_features"]

    # Pad the batch only to the f32 sublane tile (8), never to tile_b.
    padded_batch = _round_up(batch, 8)
    if padded_batch != batch:
        x = jnp.pad(x, ((0, padded_batch - batch), (0, 0)))

    # Batch tile: multiple of 8 (f32 sublane), capped by the padded batch.
    tile_b = max(8, min(_round_up(tile_b, 8), padded_batch))
    # v7x megacore: guarantee >= 2 grid steps when the batch allows, so the
    # "parallel" batch axis actually feeds both TensorCores.
    if padded_batch > 8 and pl.cdiv(padded_batch, tile_b) < 2:
        tile_b = _round_up(pl.cdiv(padded_batch, 2), 8)
    grid = (pl.cdiv(padded_batch, tile_b),)

    # Weights/biases: constant block index -> VMEM-resident; single buffer.
    resident = pl.Buffered(1)
    in_specs = [pl.BlockSpec((tile_b, n_features), lambda i: (i, 0))]
    for li in range(n_linear):
        in_p, out_p = padded[li], padded[li + 1]
        in_specs.append(
            pl.BlockSpec((in_p, out_p), lambda i: (0, 0), pipeline_mode=resident)
        )
        in_specs.append(
            pl.BlockSpec((1, out_p), lambda i: (0, 0), pipeline_mode=resident)
        )

    kernel = functools.partial(_mlp_kernel, n_linear)
    out = pl.pallas_call(
        kernel,
        out_shape=jax.ShapeDtypeStruct((padded_batch, n_classes), jnp.float32),
        grid_spec=pltpu.PrefetchScalarGridSpec(
            num_scalar_prefetch=0,
            grid=grid,
            in_specs=in_specs,
            out_specs=pl.BlockSpec((tile_b, n_classes), lambda i: (i, 0)),
        ),
        compiler_params=pltpu.CompilerParams(
            dimension_semantics=("parallel",),
            vmem_limit_bytes=_vmem_limit_bytes(),
        ),
    )(x, *flat_params)

    return out[:batch]


def init_mlp_classifier_params(key, hidden_size, n_features, n_classes, n_layers):
    """Deterministic PyTorch-style Linear init (uniform(-1/sqrt(in), 1/sqrt(in)))."""
    sizes = [n_features] + [hidden_size] * n_layers + [n_classes]
    params = []
    for in_size, out_size in zip(sizes[:-1], sizes[1:]):
        key, kw, kb = jax.random.split(key, 3)
        bound = 1.0 / (in_size ** 0.5)
        # PyTorch stores W as (out, in); we keep the transposed (in, out) copy.
        w_t = jax.random.uniform(
            kw, (in_size, out_size), jnp.float32, minval=-bound, maxval=bound
        )
        b = jax.random.uniform(
            kb, (1, out_size), jnp.float32, minval=-bound, maxval=bound
        )
        params.append((w_t, b))
    return params


def _reference_forward(x, params):
    """Pure f32 reference matching the PyTorch module."""
    h = x
    for i, (w_t, b) in enumerate(params):
        h = h @ w_t + b
        if i < len(params) - 1:
            h = jnp.maximum(h, 0.0)
    return h


if __name__ == "__main__":
    # Shapes consistent with MLPClassifier(hidden_size=32, n_features=32,
    # n_classes=8, n_layers=2): 3 Linear layers total.
    batch, n_features, hidden_size, n_classes, n_layers = 2, 32, 32, 8, 2

    key = jax.random.PRNGKey(0)
    key, kx = jax.random.split(key)
    x = jax.random.normal(kx, (batch, n_features), jnp.float32)

    params = init_mlp_classifier_params(
        key, hidden_size, n_features, n_classes, n_layers
    )
    # One-time parameter prep (padding + bf16 cast), reused across calls.
    flat_params, meta = prepare_mlp_params(params)
    flat_params = jax.block_until_ready(flat_params)

    out = mlp_classifier_forward(x, flat_params, meta)
    out = jax.block_until_ready(out)
    ref = _reference_forward(x, params)
    assert out.shape == (batch, n_classes)
    # bf16 MXU operands with f32 accumulation -> loosened tolerance vs f32 ref.
    assert jnp.allclose(out, ref, atol=3e-2, rtol=3e-2)

    # Second case: multi-step batch grid with a partial final block
    # (batch=200, tile_b=64 -> grid of 4, last block masked to 8 valid rows).
    batch2 = 200
    key, kx2 = jax.random.split(key)
    x2 = jax.random.normal(kx2, (batch2, n_features), jnp.float32)
    out2 = mlp_classifier_forward(x2, flat_params, meta, tile_b=64)
    out2 = jax.block_until_ready(out2)
    ref2 = _reference_forward(x2, params)
    assert out2.shape == (batch2, n_classes)
    assert jnp.allclose(out2, ref2, atol=3e-2, rtol=3e-2)

    print("KERNEL_OK")
</pallas_src>

<mosaic_0001>
module attributes {stable_mosaic.version = 11 : i64} {
  func.func @_mlp_kernel(%arg0: i32, %arg1: memref<8x32xf32, #tpu.memory_space<vmem>>, %arg2: memref<32x128xbf16, #tpu.memory_space<vmem>>, %arg3: memref<1x128xf32, #tpu.memory_space<vmem>>, %arg4: memref<128x128xbf16, #tpu.memory_space<vmem>>, %arg5: memref<1x128xf32, #tpu.memory_space<vmem>>, %arg6: memref<128x8xbf16, #tpu.memory_space<vmem>>, %arg7: memref<1x8xf32, #tpu.memory_space<vmem>>, %arg8: memref<8x8xf32, #tpu.memory_space<vmem>>) attributes {dimension_semantics = [#tpu.dimension_semantics<parallel>], iteration_bounds = array<i64: 1>, scalar_prefetch = 0 : i64, scratch_operands = 0 : i64, tpu.core_type = #tpu.core_type<tc>, window_params = [{transform_indices = @transform_0, window_bounds = array<i64: 8, 32>}, {pipeline_mode = #tpu.pipeline_mode<synchronous>, transform_indices = @transform_1, window_bounds = array<i64: 32, 128>}, {pipeline_mode = #tpu.pipeline_mode<synchronous>, transform_indices = @transform_2, window_bounds = array<i64: 1, 128>}, {pipeline_mode = #tpu.pipeline_mode<synchronous>, transform_indices = @transform_3, window_bounds = array<i64: 128, 128>}, {pipeline_mode = #tpu.pipeline_mode<synchronous>, transform_indices = @transform_4, window_bounds = array<i64: 1, 128>}, {pipeline_mode = #tpu.pipeline_mode<synchronous>, transform_indices = @transform_5, window_bounds = array<i64: 128, 8>}, {pipeline_mode = #tpu.pipeline_mode<synchronous>, transform_indices = @transform_6, window_bounds = array<i64: 1, 8>}, {transform_indices = @transform_7, window_bounds = array<i64: 8, 8>}]} {
    %c0 = arith.constant 0 : index
    %c0_0 = arith.constant 0 : index
    %0 = vector.load %arg1[%c0, %c0_0] : memref<8x32xf32, #tpu.memory_space<vmem>>, vector<8x32xf32>
    %1 = arith.truncf %0 : vector<8x32xf32> to vector<8x32xbf16>
    %c0_1 = arith.constant 0 : index
    %c0_2 = arith.constant 0 : index
    %2 = vector.load %arg2[%c0_1, %c0_2] : memref<32x128xbf16, #tpu.memory_space<vmem>>, vector<32x128xbf16>
    %c0_3 = arith.constant 0 : index
    %c0_4 = arith.constant 0 : index
    %3 = vector.load %arg3[%c0_3, %c0_4] : memref<1x128xf32, #tpu.memory_space<vmem>>, vector<1x128xf32>
    %cst = arith.constant dense<0.000000e+00> : vector<8x128xf32>
    %4 = tpu.matmul %1, %2, %cst {dimension_numbers = #tpu.dot_dimension_numbers<[1], [0], [0], [1], [0, 0, 1, 1], [], []>} : vector<8x32xbf16>, vector<32x128xbf16>, vector<8x128xf32> -> vector<8x128xf32>
    %5 = vector.broadcast %3 : vector<1x128xf32> to vector<8x128xf32>
    %6 = arith.addf %4, %5 : vector<8x128xf32>
    %cst_5 = arith.constant 0.000000e+00 : f32
    %7 = vector.broadcast %cst_5 : f32 to vector<8x128xf32>
    %8 = arith.maximumf %6, %7 : vector<8x128xf32>
    %9 = arith.truncf %8 : vector<8x128xf32> to vector<8x128xbf16>
    %c0_6 = arith.constant 0 : index
    %c0_7 = arith.constant 0 : index
    %10 = vector.load %arg4[%c0_6, %c0_7] : memref<128x128xbf16, #tpu.memory_space<vmem>>, vector<128x128xbf16>
    %c0_8 = arith.constant 0 : index
    %c0_9 = arith.constant 0 : index
    %11 = vector.load %arg5[%c0_8, %c0_9] : memref<1x128xf32, #tpu.memory_space<vmem>>, vector<1x128xf32>
    %cst_10 = arith.constant dense<0.000000e+00> : vector<8x128xf32>
    %12 = tpu.matmul %9, %10, %cst_10 {dimension_numbers = #tpu.dot_dimension_numbers<[1], [0], [0], [1], [0, 0, 1, 1], [], []>} : vector<8x128xbf16>, vector<128x128xbf16>, vector<8x128xf32> -> vector<8x128xf32>
    %13 = vector.broadcast %11 : vector<1x128xf32> to vector<8x128xf32>
    %14 = arith.addf %12, %13 : vector<8x128xf32>
    %cst_11 = arith.constant 0.000000e+00 : f32
    %15 = vector.broadcast %cst_11 : f32 to vector<8x128xf32>
    %16 = arith.maximumf %14, %15 : vector<8x128xf32>
    %17 = arith.truncf %16 : vector<8x128xf32> to vector<8x128xbf16>
    %c0_12 = arith.constant 0 : index
    %c0_13 = arith.constant 0 : index
    %18 = vector.load %arg6[%c0_12, %c0_13] : memref<128x8xbf16, #tpu.memory_space<vmem>>, vector<128x8xbf16>
    %c0_14 = arith.constant 0 : index
    %c0_15 = arith.constant 0 : index
    %19 = vector.load %arg7[%c0_14, %c0_15] : memref<1x8xf32, #tpu.memory_space<vmem>>, vector<1x8xf32>
    %cst_16 = arith.constant dense<0.000000e+00> : vector<8x8xf32>
    %20 = tpu.matmul %17, %18, %cst_16 {dimension_numbers = #tpu.dot_dimension_numbers<[1], [0], [0], [1], [0, 0, 1, 1], [], []>} : vector<8x128xbf16>, vector<128x8xbf16>, vector<8x8xf32> -> vector<8x8xf32>
    %21 = vector.broadcast %19 : vector<1x8xf32> to vector<8x8xf32>
    %22 = arith.addf %20, %21 : vector<8x8xf32>
    %c0_17 = arith.constant 0 : index
    %c0_18 = arith.constant 0 : index
    %23 = vector.load %arg8[%c0_17, %c0_18] : memref<8x8xf32, #tpu.memory_space<vmem>>, vector<8x8xf32>
    tpu.vector_store %arg8[%c0_17, %c0_18], %22 {strides = array<i32>} : memref<8x8xf32, #tpu.memory_space<vmem>>, vector<8x8xf32>,
    return
  }
  func.func @transform_0(%arg0: i32) -> (i32, i32) {
    %c0_i32 = arith.constant 0 : i32
    %c0_i32_0 = arith.constant 0 : i32
    return %arg0, %c0_i32 : i32, i32
  }
  func.func @transform_1(%arg0: i32) -> (i32, i32) {
    %c0_i32 = arith.constant 0 : i32
    %c0_i32_0 = arith.constant 0 : i32
    %c0_i32_1 = arith.constant 0 : i32
    return %c0_i32, %c0_i32_0 : i32, i32
  }
  func.func @transform_2(%arg0: i32) -> (i32, i32) {
    %c0_i32 = arith.constant 0 : i32
    %c0_i32_0 = arith.constant 0 : i32
    %c0_i32_1 = arith.constant 0 : i32
    return %c0_i32, %c0_i32_0 : i32, i32
  }
  func.func @transform_3(%arg0: i32) -> (i32, i32) {
    %c0_i32 = arith.constant 0 : i32
    %c0_i32_0 = arith.constant 0 : i32
    %c0_i32_1 = arith.constant 0 : i32
    return %c0_i32, %c0_i32_0 : i32, i32
  }
  func.func @transform_4(%arg0: i32) -> (i32, i32) {
    %c0_i32 = arith.constant 0 : i32
    %c0_i32_0 = arith.constant 0 : i32
    %c0_i32_1 = arith.constant 0 : i32
    return %c0_i32, %c0_i32_0 : i32, i32
  }
  func.func @transform_5(%arg0: i32) -> (i32, i32) {
    %c0_i32 = arith.constant 0 : i32
    %c0_i32_0 = arith.constant 0 : i32
    %c0_i32_1 = arith.constant 0 : i32
    return %c0_i32, %c0_i32_0 : i32, i32
  }
  func.func @transform_6(%arg0: i32) -> (i32, i32) {
    %c0_i32 = arith.constant 0 : i32
    %c0_i32_0 = arith.constant 0 : i32
    %c0_i32_1 = arith.constant 0 : i32
    return %c0_i32, %c0_i32_0 : i32, i32
  }
  func.func @transform_7(%arg0: i32) -> (i32, i32) {
    %c0_i32 = arith.constant 0 : i32
    %c0_i32_0 = arith.constant 0 : i32
    return %arg0, %c0_i32 : i32, i32
  }
}

</mosaic_0001>

<llo_original>
// kernel: tpu_custom_call.1
$region0: #{tpu_custom_call.1}
  #allocation0 [shape = 'u32[]', space=smem, size = 0x4, offset = 0x4, fixed_abs, tag = 'smem constant byte address 0x4 - core index']
  #allocation1 [shape = 'u32[72,128]{1,0:T(1,128)}', space=vmem, size = 0x9000, scoped, tag = 'internal scratch']
  %s0 = inlined_call_operand.hbm [shape: f32[8,32], index: 0, kind: input, shape index: {}]
  %s1 = inlined_call_operand.hbm [shape: bf16[32,128], index: 1, kind: input, shape index: {}]
  %s2 = inlined_call_operand.vmem [shape: f32[1,128], index: 2, kind: input, shape index: {}]
  %s3 = inlined_call_operand.vmem [shape: bf16[128,128], index: 3, kind: input, shape index: {}]
  %s4 = inlined_call_operand.vmem [shape: f32[1,128], index: 4, kind: input, shape index: {}]
  %s5 = inlined_call_operand.vmem [shape: bf16[128,8], index: 5, kind: input, shape index: {}]
  %s6 = inlined_call_operand.vmem [shape: f32[1,8], index: 6, kind: input, shape index: {}]
  %s7 = inlined_call_operand.hbm [shape: f32[8,8], index: 7, kind: output, shape index: {}]
  %s8 = sld [smem:[#allocation0]]
  $region46: #{tpu_custom_call.1} parent=0
    _
  %s10 = ssub.s32 1, %s8
  %s11 = scalar_select 0, %s10, %s8
  $region1: #{tpu_custom_call.1} parent=0
    #allocation2 [shape = 'u8[4096]{0}', space=vmem, size = 0x1000, scoped, tag = 'input window, operand 0, single buffered']
    #allocation3 [shape = 's32[1]{0}', space=sflag, size = 0x4, scoped, tag = 'scoped memory for tpu_custom_call.1']
    #allocation4 [shape = 's32[1]{0}', space=sflag, size = 0x4, scoped, tag = 'scoped memory for tpu_custom_call.1']
    #allocation5 [shape = 'u8[8192]{0}', space=vmem, size = 0x2000, scoped, tag = 'input window, operand 1, single buffered']
    #allocation6 [shape = 's32[1]{0}', space=sflag, size = 0x4, scoped, tag = 'scoped memory for tpu_custom_call.1']
    #allocation7 [shape = 'u8[4096]{0}', space=vmem, size = 0x1000, scoped, tag = 'output window, operand 0, single buffered']
    %12 = vsyncpa [#allocation3], 0
    %13 = vsyncpa [#allocation6], 0
    %14 = vsyncpa [#allocation4], 0
    // Predicated region
    $region2: #{tpu_custom_call.1} parent=1 // pred_check
      _
    $region3: #{tpu_custom_call.1} parent=1 // pred_check_branch
      %16 = sbr.rel (0) target = $region5
    $region4: #{tpu_custom_call.1} parent=1 // pred_region
      %18 = vsyncadd [#allocation3], 0
      %s20 = sshll.u32 %s0, 4
      %s21 = int_to_ptr.hbm [resolvable:$true] %s20
      %s22 = sshll.u32 [#allocation2], 4
      %s23 = int_to_ptr.vmem [resolvable:$true] %s22
      %25 = dma.hbm_to_vmem [thread:$0]  %s21, 128, %s23, [#allocation3]
    $region5: #{tpu_custom_call.1} parent=1 // pred_fallthru
      _
    // Predicated region
    $region6: #{tpu_custom_call.1} parent=1 // pred_check
      _
    $region7: #{tpu_custom_call.1} parent=1 // pred_check_branch
      %27 = sbr.rel (0) target = $region9
    $region8: #{tpu_custom_call.1} parent=1 // pred_region
      %29 = vsyncadd [#allocation6], 0
      %s30 = sshll.u32 %s1, 4
      %s31 = int_to_ptr.hbm [resolvable:$true] %s30
      %s32 = sshll.u32 [#allocation5], 4
      %s33 = int_to_ptr.vmem [resolvable:$true] %s32
      %38 = dma.hbm_to_vmem [thread:$0]  %s31, 256, %s33, [#allocation6], 64, 64, 4
    $region9: #{tpu_custom_call.1} parent=1 // pred_fallthru
      _
    // Predicated region
    $region10: #{tpu_custom_call.1} parent=1 // pred_check
      _
    $region11: #{tpu_custom_call.1} parent=1 // pred_check_branch
      %40 = sbr.rel (0) target = $region13
    $region12: #{tpu_custom_call.1} parent=1 // pred_region
      _
    $region13: #{tpu_custom_call.1} parent=1 // pred_fallthru
      _
    // Predicated region
    $region14: #{tpu_custom_call.1} parent=1 // pred_check
      _
    $region15: #{tpu_custom_call.1} parent=1 // pred_check_branch
      %42 = sbr.rel (0) target = $region17
    $region16: #{tpu_custom_call.1} parent=1 // pred_region
      _
    $region17: #{tpu_custom_call.1} parent=1 // pred_fallthru
      _
    // Predicated region
    $region18: #{tpu_custom_call.1} parent=1 // pred_check
      _
    $region19: #{tpu_custom_call.1} parent=1 // pred_check_branch
      %44 = sbr.rel (0) target = $region21
    $region20: #{tpu_custom_call.1} parent=1 // pred_region
      _
    $region21: #{tpu_custom_call.1} parent=1 // pred_fallthru
      _
    // Predicated region
    $region22: #{tpu_custom_call.1} parent=1 // pred_check
      _
    $region23: #{tpu_custom_call.1} parent=1 // pred_check_branch
      %46 = sbr.rel (0) target = $region25
    $region24: #{tpu_custom_call.1} parent=1 // pred_region
      _
    $region25: #{tpu_custom_call.1} parent=1 // pred_fallthru
      _
    // Predicated region
    $region26: #{tpu_custom_call.1} parent=1 // pred_check
      _
    $region27: #{tpu_custom_call.1} parent=1 // pred_check_branch
      %48 = sbr.rel (0) target = $region29
    $region28: #{tpu_custom_call.1} parent=1 // pred_region
      _
    $region29: #{tpu_custom_call.1} parent=1 // pred_fallthru
      _
    // Predicated region
    $region30: #{tpu_custom_call.1} parent=1 // pred_check
      _
    $region31: #{tpu_custom_call.1} parent=1 // pred_check_branch
      %50 = sbr.rel (0) target = $region33
    $region32: #{tpu_custom_call.1} parent=1 // pred_region
      %52 = dma.done [#allocation3], 128
    $region33: #{tpu_custom_call.1} parent=1 // pred_fallthru
      _
    // Predicated region
    $region34: #{tpu_custom_call.1} parent=1 // pred_check
      _
    $region35: #{tpu_custom_call.1} parent=1 // pred_check_branch
      %54 = sbr.rel (0) target = $region37
    $region36: #{tpu_custom_call.1} parent=1 // pred_region
      %56 = dma.done [#allocation6], 256
    $region37: #{tpu_custom_call.1} parent=1 // pred_fallthru
      _
    %v58 = vld [vmem:[#allocation2] sm:$0xff]
    %v59 = vpack.c.bf16 %v58, %v58
    %v60 = vld [vmem:[#allocation5] sm:$0xf]
    %v61 = vld [vmem:[#allocation5 + $0x4] sm:$0xf]
    %v62 = vld [vmem:[#allocation5 + $0x8] sm:$0xf]
    %v63 = vld [vmem:[#allocation5 + $0xc] sm:$0xf]
    %v64 = vld [vmem:[%s2] sm:$0x1]
    %v66 = vperm.slane %v64, 0
    %v72 = vunpack.c.l.b16 %v60
    %v73 = vunpack.c.l.b16 %v61
    %v74 = vunpack.c.l.b16 %v62
    %v75 = vunpack.c.l.b16 %v63
    %v76 = vpack.c.b16 %v73, %v72
    %v77 = vpack.c.b16 %v75, %v74
    %vm80 = vcmask 261120
    %v82 = vsel %vm80, %v59, 0
    %84 = vmatpush.bf16.msra.mxu0 0
    %85 = vmatpush.bf16.msra.mxu0 0
    %86 = vmatpush.bf16.msra.mxu0 0
    %87 = vmatpush.bf16.msra.mxu0 0
    %88 = vmatpush.bf16.msra.mxu0 0
    %89 = vmatpush.bf16.msra.mxu0 0
    %90 = vmatpush.bf16.msra.mxu0 %v77
    %91 = vmatpush.bf16.msra.mxu0 %v76
    %92 = vmatmul.bf16.gmra.mxu0 %v82
    %v93 = vpop.f32.mrf.mxu0
    %v94 = vadd.f32 %v66, %v93
    %v95 = vpop.f32.mrf.mxu0
    %96 = vdwg.mxu0
    %v97 = vmax.f32 %v94, 0.0
    %v98 = vpack.c.bf16 %v97, %v97
    %v99 = vld [vmem:[%s3] sm:$0xf]
    %v100 = vld [vmem:[%s3 + $0x4] sm:$0xf]
    %v101 = vld [vmem:[%s3 + $0x8] sm:$0xf]
    %v102 = vld [vmem:[%s3 + $0xc] sm:$0xf]
    %v103 = vld [vmem:[%s3 + $0x10] sm:$0xf]
    %v104 = vld [vmem:[%s3 + $0x14] sm:$0xf]
    %v105 = vld [vmem:[%s3 + $0x18] sm:$0xf]
    %v106 = vld [vmem:[%s3 + $0x1c] sm:$0xf]
    %v107 = vld [vmem:[%s3 + $0x20] sm:$0xf]
    %v108 = vld [vmem:[%s3 + $0x24] sm:$0xf]
    %v109 = vld [vmem:[%s3 + $0x28] sm:$0xf]
    %v110 = vld [vmem:[%s3 + $0x2c] sm:$0xf]
    %v111 = vld [vmem:[%s3 + $0x30] sm:$0xf]
    %v112 = vld [vmem:[%s3 + $0x34] sm:$0xf]
    %v113 = vld [vmem:[%s3 + $0x38] sm:$0xf]
    %v114 = vld [vmem:[%s3 + $0x3c] sm:$0xf]
    %v115 = vld [vmem:[%s4] sm:$0x1]
    %v117 = vperm.slane %v115, 0
    %v135 = vunpack.c.l.b16 %v99
    %v136 = vunpack.c.l.b16 %v100
    %v137 = vunpack.c.l.b16 %v101
    %v138 = vunpack.c.l.b16 %v102
    %v139 = vunpack.c.l.b16 %v103
    %v140 = vunpack.c.l.b16 %v104
    %v141 = vunpack.c.l.b16 %v105
    %v142 = vunpack.c.l.b16 %v106
    %v143 = vunpack.c.l.b16 %v107
    %v144 = vunpack.c.l.b16 %v108
    %v145 = vunpack.c.l.b16 %v109
    %v146 = vunpack.c.l.b16 %v110
    %v147 = vunpack.c.l.b16 %v111
    %v148 = vunpack.c.l.b16 %v112
    %v149 = vunpack.c.l.b16 %v113
    %v150 = vunpack.c.l.b16 %v114
    %v151 = vpack.c.b16 %v136, %v135
    %v152 = vpack.c.b16 %v138, %v137
    %v153 = vpack.c.b16 %v140, %v139
    %v154 = vpack.c.b16 %v142, %v141
    %v155 = vpack.c.b16 %v144, %v143
    %v156 = vpack.c.b16 %v146, %v145
    %v157 = vpack.c.b16 %v148, %v147
    %v158 = vpack.c.b16 %v150, %v149
    %167 = vmatpush.bf16.msra.mxu0 %v158
    %168 = vmatpush.bf16.msra.mxu0 %v157
    %169 = vmatpush.bf16.msra.mxu0 %v156
    %170 = vmatpush.bf16.msra.mxu0 %v155
    %171 = vmatpush.bf16.msra.mxu0 %v154
    %172 = vmatpush.bf16.msra.mxu0 %v153
    %173 = vmatpush.bf16.msra.mxu0 %v152
    %174 = vmatpush.bf16.msra.mxu0 %v151
    %175 = vmatmul.bf16.gmra.mxu0 %v98
    %v176 = vpop.f32.mrf.mxu0
    %v177 = vadd.f32 %v117, %v176
    %v178 = vpop.f32.mrf.mxu0
    %179 = vdwg.mxu0
    %v180 = vmax.f32 %v177, 0.0
    %v181 = vpack.c.bf16 %v180, %v180
    %v182 = vld [vmem:[%s5] sm:$0xf]
    %v183 = vld [vmem:[%s5 + $0x4] sm:$0xf]
    %v184 = vld [vmem:[%s5 + $0x8] sm:$0xf]
    %v185 = vld [vmem:[%s5 + $0xc] sm:$0xf]
    %v186 = vld [vmem:[%s5 + $0x10] sm:$0xf]
    %v187 = vld [vmem:[%s5 + $0x14] sm:$0xf]
    %v188 = vld [vmem:[%s5 + $0x18] sm:$0xf]
    %v189 = vld [vmem:[%s5 + $0x1c] sm:$0xf]
    %v190 = vld [vmem:[%s5 + $0x20] sm:$0xf]
    %v191 = vld [vmem:[%s5 + $0x24] sm:$0xf]
    %v192 = vld [vmem:[%s5 + $0x28] sm:$0xf]
    %v193 = vld [vmem:[%s5 + $0x2c] sm:$0xf]
    %v194 = vld [vmem:[%s5 + $0x30] sm:$0xf]
    %v195 = vld [vmem:[%s5 + $0x34] sm:$0xf]
    %v196 = vld [vmem:[%s5 + $0x38] sm:$0xf]
    %v197 = vld [vmem:[%s5 + $0x3c] sm:$0xf]
    %v198 = vld [vmem:[%s6] sm:$0x1]
    %v200 = vperm.slane %v198, 0
    %v218 = vunpack.c.l.b16 %v182
    %v219 = vunpack.c.l.b16 %v183
    %v220 = vunpack.c.l.b16 %v184
    %v221 = vunpack.c.l.b16 %v185
    %v222 = vunpack.c.l.b16 %v186
    %v223 = vunpack.c.l.b16 %v187
    %v224 = vunpack.c.l.b16 %v188
    %v225 = vunpack.c.l.b16 %v189
    %v226 = vunpack.c.l.b16 %v190
    %v227 = vunpack.c.l.b16 %v191
    %v228 = vunpack.c.l.b16 %v192
    %v229 = vunpack.c.l.b16 %v193
    %v230 = vunpack.c.l.b16 %v194
    %v231 = vunpack.c.l.b16 %v195
    %v232 = vunpack.c.l.b16 %v196
    %v233 = vunpack.c.l.b16 %v197
    %v234 = vpack.c.b16 %v219, %v218
    %v235 = vpack.c.b16 %v221, %v220
    %v236 = vpack.c.b16 %v223, %v222
    %v237 = vpack.c.b16 %v225, %v224
    %v238 = vpack.c.b16 %v227, %v226
    %v239 = vpack.c.b16 %v229, %v228
    %v240 = vpack.c.b16 %v231, %v230
    %v241 = vpack.c.b16 %v233, %v232
    %250 = vmatpush.bf16.msra.mxu0 %v241
    %251 = vmatpush.bf16.msra.mxu0 %v240
    %252 = vmatpush.bf16.msra.mxu0 %v239
    %253 = vmatpush.bf16.msra.mxu0 %v238
    %254 = vmatpush.bf16.msra.mxu0 %v237
    %255 = vmatpush.bf16.msra.mxu0 %v236
    %256 = vmatpush.bf16.msra.mxu0 %v235
    %257 = vmatpush.bf16.msra.mxu0 %v234
    %258 = vmatmul.bf16.gmra.mxu0 %v181
    %v259 = vpop.f32.mrf.mxu0
    %v260 = vadd.f32 %v200, %v259
    %v261 = vpop.f32.mrf.mxu0
    %262 = vdwg.mxu0
    %vm263 = vcmask 64512
    %264 = vst.msk [vmem:[#allocation7] sm:$0xff] %vm263, %v260
    // Predicated region
    $region38: #{tpu_custom_call.1} parent=1 // pred_check
      _
    $region39: #{tpu_custom_call.1} parent=1 // pred_check_branch
      %266 = sbr.rel (0) target = $region41
    $region40: #{tpu_custom_call.1} parent=1 // pred_region
      %268 = vsyncadd [#allocation4], 0
      %s270 = sshll.u32 [#allocation7], 4
      %s271 = int_to_ptr.vmem [resolvable:$true] %s270
      %s272 = sshll.u32 %s7, 4
      %s273 = int_to_ptr.hbm [resolvable:$true] %s272
      %275 = dma.vmem_to_hbm [thread:$0]  %s271, 128, %s273, [#allocation4]
    $region41: #{tpu_custom_call.1} parent=1 // pred_fallthru
      _
    // Predicated region
    $region42: #{tpu_custom_call.1} parent=1 // pred_check
      _
    $region43: #{tpu_custom_call.1} parent=1 // pred_check_branch
      %277 = sbr.rel (0) target = $region45
    $region44: #{tpu_custom_call.1} parent=1 // pred_region
      %279 = dma.done [#allocation4], 128
    $region45: #{tpu_custom_call.1} parent=1 // pred_fallthru
      _
    %280 = vsyncpa [#allocation3], 1
    %281 = vsyncpa [#allocation6], 1
    %282 = vsyncpa [#allocation4], 1

</llo_original>
